<compile_context>
chip_gen: v5e
topology: v5e:2x2
jax: 0.10.0
libtpu: 0.0.40
codegen_flags: <defaults>
</compile_context>

<pallas_src>
import jax
import jax.numpy as jnp
from jax.experimental import pallas as pl
from jax.experimental.pallas import tpu as pltpu

# ----------------------------- sizes ---------------------------------------
B = 2            # batch
V = 32           # vertices per mesh
F = 64           # faces per mesh
FEAT_RAW = 12    # real per-face geometric features
DIN = 16         # feature block width inside the packed input (12 + ones + pad)
E = 8            # incident-EM parameter width
H = 32           # hidden width
DOUT = 32        # output width (== GT width)
DOUT_PAD = 128   # lane-dense slab width (pred lanes + loss lane + zero pad)
K12 = 32         # packed K of the fused layer-1 / EM matmul
M_PACK = 144     # packed M rows: B*F face rows + B EM rows + zero pad (mult. of 16)
OUT_ROWS = 8     # output sublane rows (B live, rest zero) -> full (8,128) f32 tile

# Correctness guards (see review): loss lane must not overwrite a pred lane,
# and all packing offsets must fit.
assert DOUT < DOUT_PAD
assert B * F + B <= M_PACK and M_PACK % 16 == 0
assert FEAT_RAW + 1 <= DIN
assert DIN + E + 1 <= K12
assert H <= DOUT_PAD and B <= OUT_ROWS


# ----------------------------- Pallas kernel --------------------------------
def _model_kernel(x_ref, pool_ref, w_ref, gt_ref, out_ref):
    # Fused layer-1 + EM-embedding matmul. x is block-diagonally packed
    # (face rows use lanes [0:DIN), EM rows use lanes [DIN:K12)) and carries
    # ones-lanes, so biases come out of the weight slab for free.
    # N is lane-dense 128 (lanes >= H are zero rows of w) -> same MXU cadence
    # as an N=32 push, and no lane slicing of the packed weight slab.
    h = jnp.dot(x_ref[...], w_ref[0:K12, :],
                preferred_element_type=jnp.float32)            # (M_PACK, 128) f32
    h = jnp.maximum(h, 0.0)                                    # ReLU on f32 VPU

    # Per-batch mean-pool over faces + EM-row add as ONE MXU matmul with a
    # constant pooling matrix (no in-kernel iota/where construction).
    pooled = jnp.dot(pool_ref[...], h.astype(jnp.bfloat16),
                     preferred_element_type=jnp.float32)       # (OUT_ROWS, 128)

    # Output head. Rows [K12+H : K12+128) of the slab are zero, so the zero
    # lanes [H:128) of `pooled` contribute nothing.
    pred = jnp.dot(pooled.astype(jnp.bfloat16),
                   w_ref[K12:K12 + DOUT_PAD, :],
                   preferred_element_type=jnp.float32)         # (OUT_ROWS, 128)

    out_ref[...] = pred                                        # full unmasked (8,128) store

    # Per-batch MSE vs GT (padded lanes/rows of pred and gt are exactly zero).
    diff = pred - gt_ref[...]
    loss = jnp.sum(diff * diff, axis=-1, keepdims=True) * (1.0 / DOUT)
    out_ref[:, DOUT:DOUT + 1] = loss                           # single narrow lane store


def _run_pallas_model(x_pack, gt_pad, pool, w_pack):
    """x_pack (M_PACK,K12) bf16, gt_pad (8,128) f32, constants -> (pred, loss)."""
    vmem = lambda: pl.BlockSpec(memory_space=pltpu.MemorySpace.VMEM)
    slab = pl.pallas_call(
        _model_kernel,
        out_shape=jax.ShapeDtypeStruct((OUT_ROWS, DOUT_PAD), jnp.float32),
        # Single invocation (no grid): whole (tiny) arrays resident in VMEM,
        # no per-operand double-buffered pipeline streams.
        in_specs=[vmem() for _ in range(4)],
        out_specs=vmem(),
    )(x_pack, pool, w_pack, gt_pad)
    return slab[:B, :DOUT], slab[:B, DOUT]


# ----------------------------- constants (built ONCE) -----------------------
def _build_constants(params):
    """Pack weights/biases and the pooling matrix into two bf16 slabs.

    Done once at model-construction time so no padding / casting / iota work
    sits on the per-forward critical path.
    """
    w1, b1, w2, b2, w3 = params

    wp = jnp.zeros((K12 + DOUT_PAD, DOUT_PAD), jnp.float32)
    wp = wp.at[0:FEAT_RAW, 0:H].set(w1)          # layer-1 weights (face features)
    wp = wp.at[FEAT_RAW, 0:H].set(b1)            # b1 rides the face ones-lane
    wp = wp.at[DIN:DIN + E, 0:H].set(w2)         # EM embedding weights
    wp = wp.at[DIN + E, 0:H].set(b2)             # b2 rides the EM ones-lane
    wp = wp.at[K12:K12 + H, 0:DOUT].set(w3)      # output head (lanes >= DOUT zero)
    w_pack = wp.astype(jnp.bfloat16)

    pool = jnp.zeros((OUT_ROWS, M_PACK), jnp.float32)
    for b in range(B):
        pool = pool.at[b, b * F:(b + 1) * F].set(1.0 / F)   # mean over that batch's faces
        pool = pool.at[b, B * F + b].set(1.0)               # + that batch's EM row
    pool = pool.astype(jnp.bfloat16)

    return pool, w_pack


# ----------------------------- JAX glue -------------------------------------
def _build_face_features(vertices, faces, face_edges):
    """Gather per-face geometric features (plain-JAX glue, fused into the jit)."""
    def per_batch(v, f, fe):
        tri = v[f]                              # (F, 3, 3) vertex coords per face
        centroid = tri.mean(axis=1)             # (F, 3)
        e1 = tri[:, 1] - tri[:, 0]              # (F, 3)
        e2 = tri[:, 2] - tri[:, 0]              # (F, 3)
        nbr = centroid[fe].mean(axis=1)         # (F, 3) neighbor-face centroids
        return jnp.concatenate([centroid, e1, e2, nbr], axis=-1)  # (F, FEAT_RAW)
    return jax.vmap(per_batch)(vertices, faces, face_edges)


def _pack_inputs(face_feat, in_em):
    """Block-diagonally pack face features and EM params into one bf16 M-slab."""
    feat2d = face_feat.reshape(B * F, FEAT_RAW)
    feat_rows = jnp.concatenate(
        [feat2d,
         jnp.ones((B * F, 1), jnp.float32),                      # ones-lane -> b1
         jnp.zeros((B * F, K12 - FEAT_RAW - 1), jnp.float32)],
        axis=-1)                                                 # (B*F, K12)
    em_rows = jnp.concatenate(
        [jnp.zeros((B, DIN), jnp.float32),
         in_em.astype(jnp.float32),
         jnp.ones((B, 1), jnp.float32),                          # ones-lane -> b2
         jnp.zeros((B, K12 - DIN - E - 1), jnp.float32)],
        axis=-1)                                                 # (B, K12)
    tail = jnp.zeros((M_PACK - B * F - B, K12), jnp.float32)
    return jnp.concatenate([feat_rows, em_rows, tail], axis=0).astype(jnp.bfloat16)


def make_inner_model(params):
    """Synthesized inner model with the keyword signature WrappedModel expects."""
    pool, w_pack = _build_constants(params)   # hoisted out of the per-call path

    @jax.jit
    def _forward(vertices, faces, face_edges, in_em, GT):
        # Gather + packing + Pallas kernel live in ONE compiled region.
        face_feat = _build_face_features(vertices, faces, face_edges)
        x_pack = _pack_inputs(face_feat, in_em)
        gt_pad = jnp.pad(GT.astype(jnp.float32),
                         ((0, OUT_ROWS - B), (0, DOUT_PAD - DOUT)))
        return _run_pallas_model(x_pack, gt_pad, pool, w_pack)

    def model(*, vertices, faces, face_edges, in_em, GT, device):
        # TODO(synk): `device` is a torch placement handle; no JAX/Pallas
        # equivalent is needed (arrays already live on the default TPU backend).
        del device
        return _forward(vertices, faces, face_edges, in_em, GT)

    return model


class WrappedModel:
    """Mirrors torch WrappedModel.forward: pure keyword-argument plumbing."""

    def __init__(self, model):
        self.model = model

    def __call__(self, *inputs):
        return self.model(vertices=inputs[0], faces=inputs[1],
                          face_edges=inputs[2], in_em=inputs[3],
                          GT=inputs[4], device=inputs[5])


# ----------------------------- main ------------------------------------------
if __name__ == "__main__":
    key = jax.random.PRNGKey(0)
    kv, kf, ke, kem, kgt, kp = jax.random.split(key, 6)

    vertices = jax.random.normal(kv, (B, V, 3), dtype=jnp.float32)
    faces = jax.random.randint(kf, (B, F, 3), 0, V, dtype=jnp.int32)
    face_edges = jax.random.randint(ke, (B, F, 3), 0, F, dtype=jnp.int32)
    in_em = jax.random.normal(kem, (B, E), dtype=jnp.float32)
    GT = jax.random.normal(kgt, (B, DOUT), dtype=jnp.float32)

    # Deterministic parameter init (synthetic weights, not a checkpoint).
    p1, p2, p3 = jax.random.split(kp, 3)
    params = (
        jax.random.normal(p1, (FEAT_RAW, H), dtype=jnp.float32) * 0.1,  # w1
        jnp.zeros((H,), dtype=jnp.float32),                              # b1
        jax.random.normal(p2, (E, H), dtype=jnp.float32) * 0.1,          # w2
        jnp.zeros((H,), dtype=jnp.float32),                              # b2
        jax.random.normal(p3, (H, DOUT), dtype=jnp.float32) * 0.1,       # w3
    )

    wrapped = WrappedModel(make_inner_model(params))
    pred, loss = wrapped(vertices, faces, face_edges, in_em, GT, "tpu")
    jax.block_until_ready((pred, loss))

    assert pred.shape == (B, DOUT) and loss.shape == (B,)
    assert bool(jnp.all(jnp.isfinite(pred))) and bool(jnp.all(jnp.isfinite(loss)))
    print("KERNEL_OK")
</pallas_src>

<mosaic_0001>
module attributes {stable_mosaic.version = 11 : i64} {
  func.func @_model_kernel(%arg0: memref<144x32xbf16, #tpu.memory_space<vmem>>, %arg1: memref<8x144xbf16, #tpu.memory_space<vmem>>, %arg2: memref<160x128xbf16, #tpu.memory_space<vmem>>, %arg3: memref<8x128xf32, #tpu.memory_space<vmem>>, %arg4: memref<8x128xf32, #tpu.memory_space<vmem>>) attributes {dimension_semantics = [], scalar_prefetch = 0 : i64, scratch_operands = 0 : i64, tpu.core_type = #tpu.core_type<tc>} {
    %c0 = arith.constant 0 : index
    %c0_0 = arith.constant 0 : index
    %0 = vector.load %arg0[%c0, %c0_0] : memref<144x32xbf16, #tpu.memory_space<vmem>>, vector<144x32xbf16>
    %c0_1 = arith.constant 0 : index
    %c0_2 = arith.constant 0 : index
    %1 = vector.load %arg2[%c0_1, %c0_2] : memref<160x128xbf16, #tpu.memory_space<vmem>>, vector<32x128xbf16>
    %cst = arith.constant dense<0.000000e+00> : vector<144x128xf32>
    %2 = tpu.matmul %0, %1, %cst {dimension_numbers = #tpu.dot_dimension_numbers<[1], [0], [0], [1], [0, 0, 1, 1], [], []>} : vector<144x32xbf16>, vector<32x128xbf16>, vector<144x128xf32> -> vector<144x128xf32>
    %cst_3 = arith.constant 0.000000e+00 : f32
    %3 = vector.broadcast %cst_3 : f32 to vector<144x128xf32>
    %4 = arith.maximumf %2, %3 : vector<144x128xf32>
    %c0_4 = arith.constant 0 : index
    %c0_5 = arith.constant 0 : index
    %5 = vector.load %arg1[%c0_4, %c0_5] : memref<8x144xbf16, #tpu.memory_space<vmem>>, vector<8x144xbf16>
    %6 = arith.truncf %4 : vector<144x128xf32> to vector<144x128xbf16>
    %cst_6 = arith.constant dense<0.000000e+00> : vector<8x128xf32>
    %7 = tpu.matmul %5, %6, %cst_6 {dimension_numbers = #tpu.dot_dimension_numbers<[1], [0], [0], [1], [0, 0, 1, 1], [], []>} : vector<8x144xbf16>, vector<144x128xbf16>, vector<8x128xf32> -> vector<8x128xf32>
    %8 = arith.truncf %7 : vector<8x128xf32> to vector<8x128xbf16>
    %c32 = arith.constant 32 : index
    %c0_7 = arith.constant 0 : index
    %9 = vector.load %arg2[%c32, %c0_7] : memref<160x128xbf16, #tpu.memory_space<vmem>>, vector<128x128xbf16>
    %cst_8 = arith.constant dense<0.000000e+00> : vector<8x128xf32>
    %10 = tpu.matmul %8, %9, %cst_8 {dimension_numbers = #tpu.dot_dimension_numbers<[1], [0], [0], [1], [0, 0, 1, 1], [], []>} : vector<8x128xbf16>, vector<128x128xbf16>, vector<8x128xf32> -> vector<8x128xf32>
    %c0_9 = arith.constant 0 : index
    %c0_10 = arith.constant 0 : index
    %11 = vector.load %arg4[%c0_9, %c0_10] : memref<8x128xf32, #tpu.memory_space<vmem>>, vector<8x128xf32>
    tpu.vector_store %arg4[%c0_9, %c0_10], %10 {strides = array<i32>} : memref<8x128xf32, #tpu.memory_space<vmem>>, vector<8x128xf32>,
    %c0_11 = arith.constant 0 : index
    %c0_12 = arith.constant 0 : index
    %12 = vector.load %arg3[%c0_11, %c0_12] : memref<8x128xf32, #tpu.memory_space<vmem>>, vector<8x128xf32>
    %13 = arith.subf %10, %12 : vector<8x128xf32>
    %14 = arith.mulf %13, %13 : vector<8x128xf32>
    %cst_13 = arith.constant dense<0.000000e+00> : vector<8xf32>
    %15 = vector.multi_reduction <add>, %14, %cst_13 [1] : vector<8x128xf32> to vector<8xf32>
    %16 = vector.shape_cast %15 : vector<8xf32> to vector<8x1xf32>
    %cst_14 = arith.constant 3.125000e-02 : f32
    %17 = vector.broadcast %cst_14 : f32 to vector<8x1xf32>
    %18 = arith.mulf %16, %17 : vector<8x1xf32>
    %c0_15 = arith.constant 0 : index
    %c32_16 = arith.constant 32 : index
    %19 = vector.load %arg4[%c0_15, %c32_16] : memref<8x128xf32, #tpu.memory_space<vmem>>, vector<8x1xf32>
    tpu.vector_store %arg4[%c0_15, %c32_16], %18 {strides = array<i32>} : memref<8x128xf32, #tpu.memory_space<vmem>>, vector<8x1xf32>,
    return
  }
}

</mosaic_0001>

<llo_original>
// kernel: _forward.1
$region0: #{_forward.1}
  #allocation0 [shape = 'u32[]', space=smem, size = 0x4, offset = 0x4, fixed_abs, tag = 'smem constant byte address 0x4 - core index']
  #allocation1 [shape = 'u32[72,128]{1,0:T(1,128)}', space=vmem, size = 0x9000, scoped, tag = 'internal scratch']
  %s0 = inlined_call_operand.vmem [shape: bf16[144,32], index: 0, kind: input, shape index: {}]
  %s1 = inlined_call_operand.vmem [shape: bf16[8,144], index: 1, kind: input, shape index: {}]
  %s2 = inlined_call_operand.vmem [shape: bf16[160,128], index: 2, kind: input, shape index: {}]
  %s3 = inlined_call_operand.vmem [shape: f32[8,128], index: 3, kind: input, shape index: {}]
  %s4 = inlined_call_operand.vmem [shape: f32[8,128], index: 4, kind: output, shape index: {}]
  %s5 = sld [smem:[#allocation0]]
  $region26: #{_forward.1} parent=0
    _
  %s7 = ssub.s32 1, %s5
  %s8 = scalar_select 0, %s7, %s5
  // Predicated region
  $region2: #{_forward.1} parent=0 // pred_check
    _
  $region3: #{_forward.1} parent=0 // pred_check_branch
    %10 = sbr.rel (0) target = $region5
  $region4: #{_forward.1} parent=0 // pred_region
    _
  $region5: #{_forward.1} parent=0 // pred_fallthru
    _
  // Predicated region
  $region6: #{_forward.1} parent=0 // pred_check
    _
  $region7: #{_forward.1} parent=0 // pred_check_branch
    %12 = sbr.rel (0) target = $region9
  $region8: #{_forward.1} parent=0 // pred_region
    _
  $region9: #{_forward.1} parent=0 // pred_fallthru
    _
  // Predicated region
  $region10: #{_forward.1} parent=0 // pred_check
    _
  $region11: #{_forward.1} parent=0 // pred_check_branch
    %14 = sbr.rel (0) target = $region13
  $region12: #{_forward.1} parent=0 // pred_region
    _
  $region13: #{_forward.1} parent=0 // pred_fallthru
    _
  // Predicated region
  $region14: #{_forward.1} parent=0 // pred_check
    _
  $region15: #{_forward.1} parent=0 // pred_check_branch
    %16 = sbr.rel (0) target = $region17
  $region16: #{_forward.1} parent=0 // pred_region
    _
  $region17: #{_forward.1} parent=0 // pred_fallthru
    _
  %v18 = vld [vmem:[%s0] sm:$0xf]
  %v19 = vld [vmem:[%s0 + $0x4] sm:$0xf]
  %v20 = vld [vmem:[%s0 + $0x8] sm:$0xf]
  %v21 = vld [vmem:[%s0 + $0xc] sm:$0xf]
  %v22 = vld [vmem:[%s0 + $0x10] sm:$0xf]
  %v23 = vld [vmem:[%s0 + $0x14] sm:$0xf]
  %v24 = vld [vmem:[%s0 + $0x18] sm:$0xf]
  %v25 = vld [vmem:[%s0 + $0x1c] sm:$0xf]
  %v26 = vld [vmem:[%s0 + $0x20] sm:$0xf]
  %v27 = vld [vmem:[%s0 + $0x24] sm:$0xf]
  %v28 = vld [vmem:[%s0 + $0x28] sm:$0xf]
  %v29 = vld [vmem:[%s0 + $0x2c] sm:$0xf]
  %v30 = vld [vmem:[%s0 + $0x30] sm:$0xf]
  %v31 = vld [vmem:[%s0 + $0x34] sm:$0xf]
  %v32 = vld [vmem:[%s0 + $0x38] sm:$0xf]
  %v33 = vld [vmem:[%s0 + $0x3c] sm:$0xf]
  %v34 = vld [vmem:[%s0 + $0x40] sm:$0xf]
  %v35 = vld [vmem:[%s0 + $0x44] sm:$0xf]
  %v36 = vld [vmem:[%s2] sm:$0xf]
  %v37 = vld [vmem:[%s2 + $0x4] sm:$0xf]
  %v38 = vld [vmem:[%s2 + $0x8] sm:$0xf]
  %v39 = vld [vmem:[%s2 + $0xc] sm:$0xf]
  %v58 = vunpack.c.l.b16 %v18
  %v59 = vunpack.c.l.b16 %v19
  %v60 = vunpack.c.l.b16 %v20
  %v61 = vunpack.c.l.b16 %v21
  %v62 = vunpack.c.l.b16 %v22
  %v63 = vunpack.c.l.b16 %v23
  %v64 = vunpack.c.l.b16 %v24
  %v65 = vunpack.c.l.b16 %v25
  %v66 = vunpack.c.l.b16 %v26
  %v67 = vunpack.c.l.b16 %v27
  %v68 = vunpack.c.l.b16 %v28
  %v69 = vunpack.c.l.b16 %v29
  %v70 = vunpack.c.l.b16 %v30
  %v71 = vunpack.c.l.b16 %v31
  %v72 = vunpack.c.l.b16 %v32
  %v73 = vunpack.c.l.b16 %v33
  %v74 = vunpack.c.l.b16 %v34
  %v75 = vunpack.c.l.b16 %v35
  %v76 = vpack.c.b16 %v59, %v58
  %v77 = vpack.c.b16 %v61, %v60
  %v78 = vpack.c.b16 %v63, %v62
  %v79 = vpack.c.b16 %v65, %v64
  %v80 = vpack.c.b16 %v67, %v66
  %v81 = vpack.c.b16 %v69, %v68
  %v82 = vpack.c.b16 %v71, %v70
  %v83 = vpack.c.b16 %v73, %v72
  %v84 = vpack.c.b16 %v75, %v74
  %v89 = vunpack.c.l.b16 %v36
  %v90 = vunpack.c.l.b16 %v37
  %v91 = vunpack.c.l.b16 %v38
  %v92 = vunpack.c.l.b16 %v39
  %v93 = vpack.c.b16 %v90, %v89
  %v94 = vpack.c.b16 %v92, %v91
  %vm97 = vcmask 261120
  %v99 = vsel %vm97, %v76, 0
  %v102 = vsel %vm97, %v77, 0
  %v105 = vsel %vm97, %v78, 0
  %v108 = vsel %vm97, %v79, 0
  %v111 = vsel %vm97, %v80, 0
  %v114 = vsel %vm97, %v81, 0
  %v117 = vsel %vm97, %v82, 0
  %v120 = vsel %vm97, %v83, 0
  %v123 = vsel %vm97, %v84, 0
  %125 = vmatpush.bf16.msra.mxu0 0
  %126 = vmatpush.bf16.msra.mxu0 0
  %127 = vmatpush.bf16.msra.mxu0 0
  %128 = vmatpush.bf16.msra.mxu0 0
  %129 = vmatpush.bf16.msra.mxu0 0
  %130 = vmatpush.bf16.msra.mxu0 0
  %131 = vmatpush.bf16.msra.mxu0 %v94
  %132 = vmatpush.bf16.msra.mxu0 %v93
  %133 = vmatmul.bf16.gmra.mxu0 %v99
  %v134 = vpop.f32.mrf.mxu0
  %v135 = vadd.f32 0.0, %v134
  %v136 = vpop.f32.mrf.mxu0
  %v137 = vadd.f32 0.0, %v136
  %138 = vmatmul.bf16.gmra.mxu0 %v102
  %v139 = vpop.f32.mrf.mxu0
  %v140 = vadd.f32 0.0, %v139
  %v141 = vpop.f32.mrf.mxu0
  %v142 = vadd.f32 0.0, %v141
  %143 = vmatmul.bf16.gmra.mxu0 %v105
  %v144 = vpop.f32.mrf.mxu0
  %v145 = vadd.f32 0.0, %v144
  %v146 = vpop.f32.mrf.mxu0
  %v147 = vadd.f32 0.0, %v146
  %148 = vmatmul.bf16.gmra.mxu0 %v108
  %v149 = vpop.f32.mrf.mxu0
  %v150 = vadd.f32 0.0, %v149
  %v151 = vpop.f32.mrf.mxu0
  %v152 = vadd.f32 0.0, %v151
  %153 = vmatmul.bf16.gmra.mxu0 %v111
  %v154 = vpop.f32.mrf.mxu0
  %v155 = vadd.f32 0.0, %v154
  %v156 = vpop.f32.mrf.mxu0
  %v157 = vadd.f32 0.0, %v156
  %158 = vmatmul.bf16.gmra.mxu0 %v114
  %v159 = vpop.f32.mrf.mxu0
  %v160 = vadd.f32 0.0, %v159
  %v161 = vpop.f32.mrf.mxu0
  %v162 = vadd.f32 0.0, %v161
  %163 = vmatmul.bf16.gmra.mxu0 %v117
  %v164 = vpop.f32.mrf.mxu0
  %v165 = vadd.f32 0.0, %v164
  %v166 = vpop.f32.mrf.mxu0
  %v167 = vadd.f32 0.0, %v166
  %168 = vmatmul.bf16.gmra.mxu0 %v120
  %v169 = vpop.f32.mrf.mxu0
  %v170 = vadd.f32 0.0, %v169
  %v171 = vpop.f32.mrf.mxu0
  %v172 = vadd.f32 0.0, %v171
  %173 = vmatmul.bf16.gmra.mxu0 %v123
  %v174 = vpop.f32.mrf.mxu0
  %v175 = vadd.f32 0.0, %v174
  %v176 = vpop.f32.mrf.mxu0
  %v177 = vadd.f32 0.0, %v176
  %178 = vdwg.mxu0
  %v179 = vmax.f32 %v135, 0.0
  %v180 = vmax.f32 %v137, 0.0
  %v181 = vmax.f32 %v140, 0.0
  %v182 = vmax.f32 %v142, 0.0
  %v183 = vmax.f32 %v145, 0.0
  %v184 = vmax.f32 %v147, 0.0
  %v185 = vmax.f32 %v150, 0.0
  %v186 = vmax.f32 %v152, 0.0
  %v187 = vmax.f32 %v155, 0.0
  %v188 = vmax.f32 %v157, 0.0
  %v189 = vmax.f32 %v160, 0.0
  %v190 = vmax.f32 %v162, 0.0
  %v191 = vmax.f32 %v165, 0.0
  %v192 = vmax.f32 %v167, 0.0
  %v193 = vmax.f32 %v170, 0.0
  %v194 = vmax.f32 %v172, 0.0
  %v195 = vmax.f32 %v175, 0.0
  %v196 = vmax.f32 %v177, 0.0
  %v197 = vld [vmem:[%s1] sm:$0xff]
  %v198 = vpack.c.bf16 %v180, %v179
  %v199 = vpack.c.bf16 %v182, %v181
  %v200 = vpack.c.bf16 %v184, %v183
  %v201 = vpack.c.bf16 %v186, %v185
  %v202 = vpack.c.bf16 %v188, %v187
  %v203 = vpack.c.bf16 %v190, %v189
  %v204 = vpack.c.bf16 %v192, %v191
  %v205 = vpack.c.bf16 %v194, %v193
  %v206 = vpack.c.bf16 %v196, %v195
  %v208 = vunpack.c.l.b16 %v197
  %v209 = vunpack.c.h.b16 %v197
  %v210 = vpack.c.b16 %v208, %v208
  %v211 = vpack.c.b16 %v209, %v209
  %vm213 = vcmask 130048
  %v215 = vsel %vm213, %v211, 0
  %217 = vmatpush.bf16.msra.mxu0 %v205
  %218 = vmatpush.bf16.msra.mxu0 %v204
  %219 = vmatpush.bf16.msra.mxu0 %v203
  %220 = vmatpush.bf16.msra.mxu0 %v202
  %221 = vmatpush.bf16.msra.mxu0 %v201
  %222 = vmatpush.bf16.msra.mxu0 %v200
  %223 = vmatpush.bf16.msra.mxu0 %v199
  %224 = vmatpush.bf16.msra.mxu0 %v198
  %225 = vmatmul.bf16.gmra.mxu0 %v210
  %v226 = vpop.f32.mrf.mxu0
  %v227 = vadd.f32 0.0, %v226
  %v228 = vpop.f32.mrf.mxu0
  %229 = vdwg.mxu0
  %230 = vmatpush.bf16.msra.mxu0 0
  %231 = vmatpush.bf16.msra.mxu0 0
  %232 = vmatpush.bf16.msra.mxu0 0
  %233 = vmatpush.bf16.msra.mxu0 0
  %234 = vmatpush.bf16.msra.mxu0 0
  %235 = vmatpush.bf16.msra.mxu0 0
  %236 = vmatpush.bf16.msra.mxu0 0
  %237 = vmatpush.bf16.msra.mxu0 %v206
  %238 = vmatmul.bf16.gmra.mxu0 %v215
  %v239 = vpop.f32.mrf.mxu0
  %v240 = vadd.f32 %v227, %v239
  %v241 = vpop.f32.mrf.mxu0
  %242 = vdwg.mxu0
  %v243 = vpack.c.bf16 %v240, %v240
  %v244 = vld [vmem:[%s2 + $0x10] sm:$0xf]
  %v245 = vld [vmem:[%s2 + $0x14] sm:$0xf]
  %v246 = vld [vmem:[%s2 + $0x18] sm:$0xf]
  %v247 = vld [vmem:[%s2 + $0x1c] sm:$0xf]
  %v248 = vld [vmem:[%s2 + $0x20] sm:$0xf]
  %v249 = vld [vmem:[%s2 + $0x24] sm:$0xf]
  %v250 = vld [vmem:[%s2 + $0x28] sm:$0xf]
  %v251 = vld [vmem:[%s2 + $0x2c] sm:$0xf]
  %v252 = vld [vmem:[%s2 + $0x30] sm:$0xf]
  %v253 = vld [vmem:[%s2 + $0x34] sm:$0xf]
  %v254 = vld [vmem:[%s2 + $0x38] sm:$0xf]
  %v255 = vld [vmem:[%s2 + $0x3c] sm:$0xf]
  %v256 = vld [vmem:[%s2 + $0x40] sm:$0xf]
  %v257 = vld [vmem:[%s2 + $0x44] sm:$0xf]
  %v258 = vld [vmem:[%s2 + $0x48] sm:$0xf]
  %v259 = vld [vmem:[%s2 + $0x4c] sm:$0xf]
  %v276 = vunpack.c.l.b16 %v244
  %v277 = vunpack.c.l.b16 %v245
  %v278 = vunpack.c.l.b16 %v246
  %v279 = vunpack.c.l.b16 %v247
  %v280 = vunpack.c.l.b16 %v248
  %v281 = vunpack.c.l.b16 %v249
  %v282 = vunpack.c.l.b16 %v250
  %v283 = vunpack.c.l.b16 %v251
  %v284 = vunpack.c.l.b16 %v252
  %v285 = vunpack.c.l.b16 %v253
  %v286 = vunpack.c.l.b16 %v254
  %v287 = vunpack.c.l.b16 %v255
  %v288 = vunpack.c.l.b16 %v256
  %v289 = vunpack.c.l.b16 %v257
  %v290 = vunpack.c.l.b16 %v258
  %v291 = vunpack.c.l.b16 %v259
  %v292 = vpack.c.b16 %v277, %v276
  %v293 = vpack.c.b16 %v279, %v278
  %v294 = vpack.c.b16 %v281, %v280
  %v295 = vpack.c.b16 %v283, %v282
  %v296 = vpack.c.b16 %v285, %v284
  %v297 = vpack.c.b16 %v287, %v286
  %v298 = vpack.c.b16 %v289, %v288
  %v299 = vpack.c.b16 %v291, %v290
  %308 = vmatpush.bf16.msra.mxu0 %v299
  %309 = vmatpush.bf16.msra.mxu0 %v298
  %310 = vmatpush.bf16.msra.mxu0 %v297
  %311 = vmatpush.bf16.msra.mxu0 %v296
  %312 = vmatpush.bf16.msra.mxu0 %v295
  %313 = vmatpush.bf16.msra.mxu0 %v294
  %314 = vmatpush.bf16.msra.mxu0 %v293
  %315 = vmatpush.bf16.msra.mxu0 %v292
  %316 = vmatmul.bf16.gmra.mxu0 %v243
  %v317 = vpop.f32.mrf.mxu0
  %v318 = vadd.f32 0.0, %v317
  %v319 = vpop.f32.mrf.mxu0
  %320 = vdwg.mxu0
  %321 = vst [vmem:[%s4] sm:$0xff] %v318
  %v322 = vld [vmem:[%s3] sm:$0xff]
  %v323 = vsub.f32 %v318, %v322
  %v324 = vmul.f32 %v323, %v323
  %325 = vadd.xlane.f32.xlu0 %v324
  %v326 = vpop.xlane.xlu0 %325
  %v327 = vmul.f32 %v326, 0.03125
  %vm328 = vcmask 269568
  %329 = vst.msk [vmem:[%s4] sm:$0xff] %vm328, %v327
  // Predicated region
  $region18: #{_forward.1} parent=0 // pred_check
    _
  $region19: #{_forward.1} parent=0 // pred_check_branch
    %331 = sbr.rel (0) target = $region21
  $region20: #{_forward.1} parent=0 // pred_region
    _
  $region21: #{_forward.1} parent=0 // pred_fallthru
    _
  // Predicated region
  $region22: #{_forward.1} parent=0 // pred_check
    _
  $region23: #{_forward.1} parent=0 // pred_check_branch
    %333 = sbr.rel (0) target = $region25
  $region24: #{_forward.1} parent=0 // pred_region
    _
  $region25: #{_forward.1} parent=0 // pred_fallthru
    _

</llo_original>
